<compile_context>
chip_gen: v5e
topology: v5e:2x2
jax: 0.10.0
libtpu: 0.0.40
codegen_flags: <defaults>
</compile_context>

<pallas_src>
import jax
import jax.numpy as jnp
import numpy as np
from jax.experimental import pallas as pl
from jax.experimental.pallas import tpu as pltpu


# ---------------------------------------------------------------------------
# In-kernel math helpers
# ---------------------------------------------------------------------------
def _erf(x):
    # Abramowitz & Stegun 7.1.26 (|err| <= 1.5e-7 with an exact reciprocal);
    # approx reciprocal pushes the divide to the EUP slot.
    p = 0.3275911
    a1, a2, a3, a4, a5 = (0.254829592, -0.284496736, 1.421413741,
                          -1.453152027, 1.061405429)
    s = jnp.sign(x)
    ax = jnp.abs(x)
    t = pl.reciprocal(1.0 + p * ax, approx=True)
    poly = ((((a5 * t + a4) * t + a3) * t + a2) * t + a1) * t
    return s * (1.0 - poly * jnp.exp(-ax * ax))


def _gelu_exact(x):
    return 0.5 * x * (1.0 + _erf(x * 0.7071067811865476))


# ---------------------------------------------------------------------------
# Kernels
# ---------------------------------------------------------------------------
def _proj_kernel(seq_ref, w1a_ref, w1b_ref, b1_ref, a_out_ref, b_out_ref):
    """Row/col terms of classifier1 (b1 folded into the row term)."""
    s = seq_ref[0]                                              # [ts, H]
    a_out_ref[0] = (jnp.dot(s, w1a_ref[...],
                            preferred_element_type=jnp.float32)
                    + b1_ref[...]).astype(a_out_ref.dtype)
    b_out_ref[0] = jnp.dot(s, w1b_ref[...],
                           preferred_element_type=jnp.float32
                           ).astype(b_out_ref.dtype)


def _span_kernel(a_ref, b_ref, w2_ref, b2_ref, out_ref, acc_ref):
    """Span logits tile: accumulate over hidden chunks (grid axis 3).

    a_ref  : [1, ti, kc]  row term (seq @ W1[:H] + b1) chunk
    b_ref  : [1, tj, kc]  col term (seq @ W1[H:])       chunk
    w2_ref : [1, kc]      classifier2 weight chunk
    b2_ref : [1]          classifier2 bias (SMEM scalar)
    out_ref: [1, ti, tj]  span logits tile (resident across k)
    acc_ref: [ti, tj]     f32 accumulator scratch
    """
    k = pl.program_id(3)

    @pl.when(k == 0)
    def _init():
        acc_ref[...] = jnp.zeros_like(acc_ref)

    a = a_ref[0]                                                # [ti, kc]
    b = b_ref[0]                                                # [tj, kc]
    h = _gelu_exact(a[:, None, :] + b[None, :, :])              # [ti, tj, kc]
    # classifier2 chunk contribution (dropout = identity in eval mode).
    acc_ref[...] += jnp.sum(h * w2_ref[...][None, :, :], axis=-1)

    @pl.when(k == pl.num_programs(3) - 1)
    def _finish():
        out_ref[0] = (acc_ref[...] + b2_ref[0]).astype(out_ref.dtype)


# ---------------------------------------------------------------------------
# Wrapper
# ---------------------------------------------------------------------------
def _pick_tile(dim, target, quantum):
    """Largest tile <= target dividing `dim` that is a multiple of `quantum`;
    falls back to the full dim (always a legal block dim)."""
    if dim <= target or dim % quantum != 0:
        return dim
    t = (min(target, dim) // quantum) * quantum
    while t > 0 and dim % t != 0:
        t -= quantum
    return t if t > 0 else dim


def _vmem_limit_bytes(n_f32_elems):
    # 2x the live f32 footprint, clamped to [32 MiB, 60 MiB] so it stays legal
    # on v7x (64 MiB physical VMEM) while permitting larger v5e/v6e tiles.
    return int(min(max(2 * 4 * n_f32_elems, 32 * 2**20), 60 * 2**20))


def mrc_for_ner_heads(sequence_output, params, *, span_tiles=None,
                      proj_seq_tile=None):
    """Returns (start_logits [B,S], end_logits [B,S], span_logits [B,S,S])."""
    B, S, H = sequence_output.shape
    H2 = 2 * H
    dt = jnp.float32
    seq = sequence_output.astype(dt)

    # ---- start / end heads: Linear(H, 1) each, done lane-dense in XLA.
    start_logits = seq @ params["w_start"].astype(dt) + params["b_start"]
    end_logits = seq @ params["w_end"].astype(dt) + params["b_end"]

    # ---- span head parameters
    w1 = params["w1"].astype(dt)                    # [2H, 2H] (x @ W layout)
    b1 = params["b1"].reshape(1, H2).astype(dt)
    w2 = params["w2"].reshape(1, H2).astype(dt)
    b2 = params["b2"].reshape(1).astype(dt)         # scalar -> SMEM

    # ---- projection kernel: A = seq @ W1[:H] + b1, Bc = seq @ W1[H:]
    ts = proj_seq_tile if proj_seq_tile is not None else _pick_tile(S, 128, 8)
    assert S % ts == 0 and (ts % 8 == 0 or ts == S), "bad proj seq tile"

    proj_vmem = _vmem_limit_bytes(2 * (ts * H + 2 * H * H2 + H2 + 2 * ts * H2))
    a_rows, b_cols = pl.pallas_call(
        _proj_kernel,
        out_shape=(jax.ShapeDtypeStruct((B, S, H2), dt),
                   jax.ShapeDtypeStruct((B, S, H2), dt)),
        grid=(B, S // ts),
        in_specs=[
            pl.BlockSpec((1, ts, H), lambda b, si: (b, si, 0)),
            pl.BlockSpec((H, H2), lambda b, si: (0, 0)),
            pl.BlockSpec((H, H2), lambda b, si: (0, 0)),
            pl.BlockSpec((1, H2), lambda b, si: (0, 0)),
        ],
        out_specs=(
            pl.BlockSpec((1, ts, H2), lambda b, si: (b, si, 0)),
            pl.BlockSpec((1, ts, H2), lambda b, si: (b, si, 0)),
        ),
        compiler_params=pltpu.CompilerParams(
            dimension_semantics=("parallel", "parallel"),
            vmem_limit_bytes=proj_vmem),
    )(seq, w1[:H, :], w1[H:, :], b1)

    # ---- span kernel: grid (B, i-tiles, j-tiles, hidden-chunks)
    if span_tiles is not None:
        ti, tj, kc = span_tiles
    else:
        ti = _pick_tile(S, 32, 8)          # sublane-quantized row tile
        tj = _pick_tile(S, 128, 128)       # lane-dense col tile (or full S)
        kc = _pick_tile(H2, 512, 128)      # hidden chunk (or full 2H)
    assert S % ti == 0 and (ti % 8 == 0 or ti == S), "bad span i tile"
    assert S % tj == 0 and (tj % 128 == 0 or tj == S), "bad span j tile"
    assert H2 % kc == 0 and (kc % 128 == 0 or kc == H2), "bad hidden chunk"

    span_vmem = _vmem_limit_bytes(
        2 * (ti * kc + tj * kc + kc + ti * tj) + ti * tj * kc + ti * tj)
    span_logits = pl.pallas_call(
        _span_kernel,
        out_shape=jax.ShapeDtypeStruct((B, S, S), dt),
        grid=(B, S // ti, S // tj, H2 // kc),
        in_specs=[
            pl.BlockSpec((1, ti, kc), lambda b, i, j, k: (b, i, k)),
            pl.BlockSpec((1, tj, kc), lambda b, i, j, k: (b, j, k)),
            pl.BlockSpec((1, kc), lambda b, i, j, k: (0, k)),
            pl.BlockSpec(memory_space=pltpu.MemorySpace.SMEM),     # b2 scalar
        ],
        out_specs=pl.BlockSpec((1, ti, tj), lambda b, i, j, k: (b, i, j)),
        scratch_shapes=[pltpu.VMEM((ti, tj), jnp.float32)],
        compiler_params=pltpu.CompilerParams(
            dimension_semantics=("parallel", "parallel", "parallel",
                                 "arbitrary"),
            vmem_limit_bytes=span_vmem),
    )(a_rows, b_cols, w2, b2)

    return start_logits, end_logits, span_logits


# ---------------------------------------------------------------------------
# Plain-JAX reference (mirrors the PyTorch forward, labels=None path)
# ---------------------------------------------------------------------------
def reference_heads(seq, params):
    B, S, H = seq.shape
    start = seq @ params["w_start"] + params["b_start"]                 # [B,S]
    end = seq @ params["w_end"] + params["b_end"]                       # [B,S]
    start_extend = jnp.broadcast_to(seq[:, :, None, :], (B, S, S, H))
    end_extend = jnp.broadcast_to(seq[:, None, :, :], (B, S, S, H))
    span_matrix = jnp.concatenate([start_extend, end_extend], axis=-1)
    h = jax.nn.gelu(span_matrix @ params["w1"] + params["b1"],
                    approximate=False)
    span = h @ params["w2"] + params["b2"]                              # [B,S,S]
    return start, end, span


def make_params(key, hidden):
    h2 = 2 * hidden
    ks = jax.random.split(key, 8)
    scale = 0.1
    return {
        "w_start": jax.random.normal(ks[0], (hidden,), jnp.float32) * scale,
        "b_start": jax.random.normal(ks[1], (), jnp.float32) * scale,
        "w_end": jax.random.normal(ks[2], (hidden,), jnp.float32) * scale,
        "b_end": jax.random.normal(ks[3], (), jnp.float32) * scale,
        "w1": jax.random.normal(ks[4], (h2, h2), jnp.float32) * scale,
        "b1": jax.random.normal(ks[5], (h2,), jnp.float32) * scale,
        "w2": jax.random.normal(ks[6], (h2,), jnp.float32) * scale,
        "b2": jax.random.normal(ks[7], (), jnp.float32) * scale,
    }


if __name__ == "__main__":
    # Small shapes chosen so the tiling is actually exercised: S=16 with an
    # 8-row i-tile -> 2 i-steps, 2H=256 with a 128-lane chunk -> 2 reduction
    # steps on the accumulated ("arbitrary") grid axis.
    B, S, H = 2, 16, 128
    key = jax.random.PRNGKey(0)
    k_seq, k_par = jax.random.split(key)
    sequence_output = jax.random.normal(k_seq, (B, S, H), jnp.float32)
    params = make_params(k_par, H)

    start_logits, end_logits, span_logits = jax.block_until_ready(
        mrc_for_ner_heads(sequence_output, params,
                          span_tiles=(8, 16, 128), proj_seq_tile=8))

    start_ref, end_ref, span_ref = reference_heads(sequence_output, params)

    np.testing.assert_allclose(np.asarray(start_logits), np.asarray(start_ref),
                               rtol=1e-4, atol=1e-4)
    np.testing.assert_allclose(np.asarray(end_logits), np.asarray(end_ref),
                               rtol=1e-4, atol=1e-4)
    # Span tolerance covers the EUP approximate reciprocal inside the erf
    # rational (per-element gelu deviation <= ~1e-3 worst case).
    np.testing.assert_allclose(np.asarray(span_logits), np.asarray(span_ref),
                               rtol=1e-2, atol=1e-2)

    assert start_logits.shape == (B, S)
    assert end_logits.shape == (B, S)
    assert span_logits.shape == (B, S, S)
    print("KERNEL_OK")
</pallas_src>

<mosaic_0001>
module attributes {stable_mosaic.version = 11 : i64} {
  func.func @_proj_kernel(%arg0: i32, %arg1: i32, %arg2: memref<1x8x128xf32, #tpu.memory_space<vmem>>, %arg3: memref<128x256xf32, #tpu.memory_space<vmem>>, %arg4: memref<128x256xf32, #tpu.memory_space<vmem>>, %arg5: memref<1x256xf32, #tpu.memory_space<vmem>>, %arg6: memref<1x8x256xf32, #tpu.memory_space<vmem>>, %arg7: memref<1x8x256xf32, #tpu.memory_space<vmem>>) attributes {dimension_semantics = [#tpu.dimension_semantics<parallel>, #tpu.dimension_semantics<parallel>], iteration_bounds = array<i64: 2, 2>, scalar_prefetch = 0 : i64, scratch_operands = 0 : i64, tpu.core_type = #tpu.core_type<tc>, window_params = [{transform_indices = @transform_0, window_bounds = array<i64: 1, 8, 128>}, {pipeline_mode = #tpu.pipeline_mode<synchronous>, transform_indices = @transform_1, window_bounds = array<i64: 128, 256>}, {pipeline_mode = #tpu.pipeline_mode<synchronous>, transform_indices = @transform_2, window_bounds = array<i64: 128, 256>}, {pipeline_mode = #tpu.pipeline_mode<synchronous>, transform_indices = @transform_3, window_bounds = array<i64: 1, 256>}, {transform_indices = @transform_4, window_bounds = array<i64: 1, 8, 256>}, {transform_indices = @transform_5, window_bounds = array<i64: 1, 8, 256>}]} {
    %c0 = arith.constant 0 : index
    %c0_0 = arith.constant 0 : index
    %c0_1 = arith.constant 0 : index
    %0 = vector.load %arg2[%c0, %c0_0, %c0_1] : memref<1x8x128xf32, #tpu.memory_space<vmem>>, vector<1x8x128xf32>
    %1 = vector.shape_cast %0 : vector<1x8x128xf32> to vector<8x128xf32>
    %c0_2 = arith.constant 0 : index
    %c0_3 = arith.constant 0 : index
    %2 = vector.load %arg3[%c0_2, %c0_3] : memref<128x256xf32, #tpu.memory_space<vmem>>, vector<128x256xf32>
    %cst = arith.constant dense<0.000000e+00> : vector<8x256xf32>
    %3 = tpu.matmul %1, %2, %cst {dimension_numbers = #tpu.dot_dimension_numbers<[1], [0], [0], [1], [0, 0, 1, 1], [], []>} : vector<8x128xf32>, vector<128x256xf32>, vector<8x256xf32> -> vector<8x256xf32>
    %c0_4 = arith.constant 0 : index
    %c0_5 = arith.constant 0 : index
    %4 = vector.load %arg5[%c0_4, %c0_5] : memref<1x256xf32, #tpu.memory_space<vmem>>, vector<1x256xf32>
    %5 = vector.broadcast %4 : vector<1x256xf32> to vector<8x256xf32>
    %6 = arith.addf %3, %5 : vector<8x256xf32>
    %c0_6 = arith.constant 0 : index
    %c0_7 = arith.constant 0 : index
    %c0_8 = arith.constant 0 : index
    %7 = vector.load %arg6[%c0_6, %c0_7, %c0_8] : memref<1x8x256xf32, #tpu.memory_space<vmem>>, vector<1x8x256xf32>
    %8 = vector.shape_cast %7 : vector<1x8x256xf32> to vector<8x256xf32>
    %9 = vector.shape_cast %6 : vector<8x256xf32> to vector<1x8x256xf32>
    tpu.vector_store %arg6[%c0_6, %c0_7, %c0_8], %9 {strides = array<i32>} : memref<1x8x256xf32, #tpu.memory_space<vmem>>, vector<1x8x256xf32>,
    %c0_9 = arith.constant 0 : index
    %c0_10 = arith.constant 0 : index
    %10 = vector.load %arg4[%c0_9, %c0_10] : memref<128x256xf32, #tpu.memory_space<vmem>>, vector<128x256xf32>
    %cst_11 = arith.constant dense<0.000000e+00> : vector<8x256xf32>
    %11 = tpu.matmul %1, %10, %cst_11 {dimension_numbers = #tpu.dot_dimension_numbers<[1], [0], [0], [1], [0, 0, 1, 1], [], []>} : vector<8x128xf32>, vector<128x256xf32>, vector<8x256xf32> -> vector<8x256xf32>
    %c0_12 = arith.constant 0 : index
    %c0_13 = arith.constant 0 : index
    %c0_14 = arith.constant 0 : index
    %12 = vector.load %arg7[%c0_12, %c0_13, %c0_14] : memref<1x8x256xf32, #tpu.memory_space<vmem>>, vector<1x8x256xf32>
    %13 = vector.shape_cast %12 : vector<1x8x256xf32> to vector<8x256xf32>
    %14 = vector.shape_cast %11 : vector<8x256xf32> to vector<1x8x256xf32>
    tpu.vector_store %arg7[%c0_12, %c0_13, %c0_14], %14 {strides = array<i32>} : memref<1x8x256xf32, #tpu.memory_space<vmem>>, vector<1x8x256xf32>,
    return
  }
  func.func @transform_0(%arg0: i32, %arg1: i32) -> (i32, i32, i32) {
    %c0_i32 = arith.constant 0 : i32
    %c0_i32_0 = arith.constant 0 : i32
    return %arg0, %arg1, %c0_i32 : i32, i32, i32
  }
  func.func @transform_1(%arg0: i32, %arg1: i32) -> (i32, i32) {
    %c0_i32 = arith.constant 0 : i32
    %c0_i32_0 = arith.constant 0 : i32
    %c0_i32_1 = arith.constant 0 : i32
    return %c0_i32, %c0_i32_0 : i32, i32
  }
  func.func @transform_2(%arg0: i32, %arg1: i32) -> (i32, i32) {
    %c0_i32 = arith.constant 0 : i32
    %c0_i32_0 = arith.constant 0 : i32
    %c0_i32_1 = arith.constant 0 : i32
    return %c0_i32, %c0_i32_0 : i32, i32
  }
  func.func @transform_3(%arg0: i32, %arg1: i32) -> (i32, i32) {
    %c0_i32 = arith.constant 0 : i32
    %c0_i32_0 = arith.constant 0 : i32
    %c0_i32_1 = arith.constant 0 : i32
    return %c0_i32, %c0_i32_0 : i32, i32
  }
  func.func @transform_4(%arg0: i32, %arg1: i32) -> (i32, i32, i32) {
    %c0_i32 = arith.constant 0 : i32
    %c0_i32_0 = arith.constant 0 : i32
    return %arg0, %arg1, %c0_i32 : i32, i32, i32
  }
  func.func @transform_5(%arg0: i32, %arg1: i32) -> (i32, i32, i32) {
    %c0_i32 = arith.constant 0 : i32
    %c0_i32_0 = arith.constant 0 : i32
    return %arg0, %arg1, %c0_i32 : i32, i32, i32
  }
}

</mosaic_0001>

<llo_original>
// kernel: tpu_custom_call.1
$region0: #{tpu_custom_call.1}
  #allocation0 [shape = 'u32[]', space=smem, size = 0x4, offset = 0x4, fixed_abs, tag = 'smem constant byte address 0x4 - core index']
  #allocation1 [shape = 'u32[72,128]{1,0:T(1,128)}', space=vmem, size = 0x9000, scoped, tag = 'internal scratch']
  %s0 = inlined_call_operand.hbm [shape: f32[2,16,128], index: 0, kind: input, shape index: {}]
  %s1 = inlined_call_operand.hbm [shape: f32[128,256], index: 1, kind: input, shape index: {}]
  %s2 = inlined_call_operand.hbm [shape: f32[128,256], index: 2, kind: input, shape index: {}]
  %s3 = inlined_call_operand.vmem [shape: f32[1,256], index: 3, kind: input, shape index: {}]
  %s4 = inlined_call_operand.hbm [shape: f32[2,16,256], index: 4, kind: output, shape index: {0}]
  %s5 = inlined_call_operand.hbm [shape: f32[2,16,256], index: 5, kind: output, shape index: {1}]
  %6 = xla_tuple %s4, %s5
  %s7 = sld [smem:[#allocation0]]
  $region69: #{tpu_custom_call.1} parent=0
    _
  %s9 = ssub.s32 1, %s7
  %s10 = scalar_select 0, %s9, %s7
  $region1: #{tpu_custom_call.1} parent=0
    #allocation2 [shape = 'u8[8192]{0}', space=vmem, size = 0x2000, scoped, tag = 'input window, operand 0']
    #allocation3 [shape = 's32[2]{0}', space=sflag, size = 0x8, scoped, tag = 'scoped memory for tpu_custom_call.1']
    #allocation4 [shape = 's32[2]{0}', space=sflag, size = 0x8, scoped, tag = 'scoped memory for tpu_custom_call.1']
    #allocation5 [shape = 'u8[131072]{0}', space=vmem, size = 0x20000, scoped, tag = 'input window, operand 1, single buffered']
    #allocation6 [shape = 's32[1]{0}', space=sflag, size = 0x4, scoped, tag = 'scoped memory for tpu_custom_call.1']
    #allocation7 [shape = 'u8[131072]{0}', space=vmem, size = 0x20000, scoped, tag = 'input window, operand 2, single buffered']
    #allocation8 [shape = 'u8[16384]{0}', space=vmem, size = 0x4000, scoped, tag = 'output window, operand 0']
    #allocation9 [shape = 'u8[16384]{0}', space=vmem, size = 0x4000, scoped, tag = 'output window, operand 1']
    #allocation10 [shape = 's32[2]{0}', space=sflag, size = 0x8, scoped, tag = 'scoped memory for tpu_custom_call.1']
    %11 = vsyncpa [#allocation3], 0
    %s12 = scalar_lea.sflag [#allocation3], 1
    %13 = vsyncpa %s12, 0
    %14 = vsyncpa [#allocation6], 0
    %15 = vsyncpa [#allocation4], 0
    %s16 = scalar_lea.sflag [#allocation4], 1
    %17 = vsyncpa %s16, 0
    %18 = vsyncpa [#allocation10], 0
    %s19 = scalar_lea.sflag [#allocation10], 1
    %20 = vsyncpa %s19, 0
    loop: start=0, step=1, limit=6
    $region2: #{tpu_custom_call.1} parent=1 // loop_pre_header
      _
    $region3: #{tpu_custom_call.1} parent=1 // loop_header
      %s22 = sphi 0, %s26
      %p23 = scmp.ge.s32.totalorder %s22, 6
      %s29 = sphi 0, %s41
      %s30 = sphi 0, %s37
      %s31 = sphi 0, %s29
      %s32 = sphi 0, %s30
      %s33 = sphi 0, %s31
      %s34 = sphi 0, %s32
      %s46 = sphi 0, %s48
      %s49 = sphi 0, %s46
      %s50 = sphi 0, %s49
      %s66 = sphi 0, %s50
      %s70 = sphi 0, %s70
      %s72 = sphi 0, %s70
      %s73 = sphi 0, %s72
      %s87 = sphi 0, %s73
      %s91 = sphi 0, %s91
      %s93 = sphi 0, %s91
      %s94 = sphi 0, %s93
      %s108 = sphi 0, %s94
      %s112 = sphi 0, %s112
      %s114 = sphi 0, %s112
      %s115 = sphi 0, %s114
      %s129 = sphi 0, %s115
      %s137 = sphi 0, %s139
      %s140 = sphi 0, %s137
      %s141 = sphi 0, %s140
      %s157 = sphi 0, %s141
      %s165 = sphi 0, %s167
      %s168 = sphi 0, %s165
      %s169 = sphi 0, %s168
      %s185 = sphi 0, %s169
    $region4: #{tpu_custom_call.1} parent=1 // loop_header_branch
      %25 = sbr.rel (%p23) target = $region8
    $region5: #{tpu_custom_call.1} parent=1 // loop_body
      %s27 = ssub.s32 %s22, 1
      %s28 = ssub.s32 %s22, 2
      %s35 = sadd.s32 1, %s30
      %p36 = scmp.ge.s32.totalorder %s35, 2
      %s37 = scalar_select %p36, 0, %s35
      %s38 = sadd.s32 1, %s29
      %s39 = scalar_select %p36, %s38, %s29
      %p40 = scmp.ge.s32.totalorder %s39, 2
      %s41 = scalar_select %p40, 0, %s39
      %s42 = ssub.s32 %s29, %s41
      %s43 = ssub.s32 %s30, %s37
      %s44 = sor.u32 %s42, %s43
      %p45 = scmp.eq.s32.totalorder %s44, 0
      %s47 = sadd.s32 %s46, 1
      %s48 = scalar_select %p45, %s46, %s47
      %p51 = pneg %p45
      %p52 = scmp.eq.s32.totalorder %s22, 3
      %p53 = por %p51, %p52
      %p54 = scmp.ne.s32.totalorder %s46, %s49
      %p55 = scmp.eq.s32.totalorder %s22, 0
      %p56 = por %p54, %p55
      %p57 = scmp.ne.s32.totalorder %s46, %s49
      %p58 = scmp.eq.s32.totalorder %s27, 3
      %p59 = por %p57, %p58
      %p60 = scmp.ne.s32.totalorder %s49, %s50
      %p61 = scmp.eq.s32.totalorder %s27, 0
      %p62 = por %p60, %p61
      %p63 = scmp.ne.s32.totalorder %s49, %s50
      %p64 = scmp.eq.s32.totalorder %s28, 3
      %p65 = por %p63, %p64
      %p67 = scmp.ne.s32.totalorder %s50, %s66
      %p68 = scmp.eq.s32.totalorder %s28, 0
      %p69 = por %p67, %p68
      %s71 = sadd.s32 %s70, 1
      %p74 = scmp.eq.s32.totalorder %s22, 3
      %p75 = scmp.ne.s32.totalorder %s70, %s72
      %p76 = scmp.eq.s32.totalorder %s22, 0
      %p77 = por %p75, %p76
      %p78 = scmp.ne.s32.totalorder %s70, %s72
      %p79 = scmp.eq.s32.totalorder %s27, 3
      %p80 = por %p78, %p79
      %p81 = scmp.ne.s32.totalorder %s72, %s73
      %p82 = scmp.eq.s32.totalorder %s27, 0
      %p83 = por %p81, %p82
      %p84 = scmp.ne.s32.totalorder %s72, %s73
      %p85 = scmp.eq.s32.totalorder %s28, 3
      %p86 = por %p84, %p85
      %p88 = scmp.ne.s32.totalorder %s73, %s87
      %p89 = scmp.eq.s32.totalorder %s28, 0
      %p90 = por %p88, %p89
      %s92 = sadd.s32 %s91, 1
      %p95 = scmp.eq.s32.totalorder %s22, 3
      %p96 = scmp.ne.s32.totalorder %s91, %s93
      %p97 = scmp.eq.s32.totalorder %s22, 0
      %p98 = por %p96, %p97
      %p99 = scmp.ne.s32.totalorder %s91, %s93
      %p100 = scmp.eq.s32.totalorder %s27, 3
      %p101 = por %p99, %p100
      %p102 = scmp.ne.s32.totalorder %s93, %s94
      %p103 = scmp.eq.s32.totalorder %s27, 0
      %p104 = por %p102, %p103
      %p105 = scmp.ne.s32.totalorder %s93, %s94
      %p106 = scmp.eq.s32.totalorder %s28, 3
      %p107 = por %p105, %p106
      %p109 = scmp.ne.s32.totalorder %s94, %s108
      %p110 = scmp.eq.s32.totalorder %s28, 0
      %p111 = por %p109, %p110
      %s113 = sadd.s32 %s112, 1
      %p116 = scmp.eq.s32.totalorder %s22, 3
      %p117 = scmp.ne.s32.totalorder %s112, %s114
      %p118 = scmp.eq.s32.totalorder %s22, 0
      %p119 = por %p117, %p118
      %p120 = scmp.ne.s32.totalorder %s112, %s114
      %p121 = scmp.eq.s32.totalorder %s27, 3
      %p122 = por %p120, %p121
      %p123 = scmp.ne.s32.totalorder %s114, %s115
      %p124 = scmp.eq.s32.totalorder %s27, 0
      %p125 = por %p123, %p124
      %p126 = scmp.ne.s32.totalorder %s114, %s115
      %p127 = scmp.eq.s32.totalorder %s28, 3
      %p128 = por %p126, %p127
      %p130 = scmp.ne.s32.totalorder %s115, %s129
      %p131 = scmp.eq.s32.totalorder %s28, 0
      %p132 = por %p130, %p131
      %s133 = ssub.s32 %s29, %s41
      %s134 = ssub.s32 %s30, %s37
      %s135 = sor.u32 %s133, %s134
      %p136 = scmp.eq.s32.totalorder %s135, 0
      %s138 = sadd.s32 %s137, 1
      %s139 = scalar_select %p136, %s137, %s138
      %p142 = pneg %p136
      %p143 = scmp.eq.s32.totalorder %s22, 3
      %p144 = por %p142, %p143
      %p145 = scmp.ne.s32.totalorder %s137, %s140
      %p146 = scmp.eq.s32.totalorder %s22, 0
      %p147 = por %p145, %p146
      %p148 = scmp.ne.s32.totalorder %s137, %s140
      %p149 = scmp.eq.s32.totalorder %s27, 3
      %p150 = por %p148, %p149
      %p151 = scmp.ne.s32.totalorder %s140, %s141
      %p152 = scmp.eq.s32.totalorder %s27, 0
      %p153 = por %p151, %p152
      %p154 = scmp.ne.s32.totalorder %s140, %s141
      %p155 = scmp.eq.s32.totalorder %s28, 3
      %p156 = por %p154, %p155
      %p158 = scmp.ne.s32.totalorder %s141, %s157
      %p159 = scmp.eq.s32.totalorder %s28, 0
      %p160 = por %p158, %p159
      %s161 = ssub.s32 %s29, %s41
      %s162 = ssub.s32 %s30, %s37
      %s163 = sor.u32 %s161, %s162
      %p164 = scmp.eq.s32.totalorder %s163, 0
      %s166 = sadd.s32 %s165, 1
      %s167 = scalar_select %p164, %s165, %s166
      %p170 = pneg %p164
      %p171 = scmp.eq.s32.totalorder %s22, 3
      %p172 = por %p170, %p171
      %p173 = scmp.ne.s32.totalorder %s165, %s168
      %p174 = scmp.eq.s32.totalorder %s22, 0
      %p175 = por %p173, %p174
      %p176 = scmp.ne.s32.totalorder %s165, %s168
      %p177 = scmp.eq.s32.totalorder %s27, 3
      %p178 = por %p176, %p177
      %p179 = scmp.ne.s32.totalorder %s168, %s169
      %p180 = scmp.eq.s32.totalorder %s27, 0
      %p181 = por %p179, %p180
      %p182 = scmp.ne.s32.totalorder %s168, %s169
      %p183 = scmp.eq.s32.totalorder %s28, 3
      %p184 = por %p182, %p183
      %p186 = scmp.ne.s32.totalorder %s169, %s185
      %p187 = scmp.eq.s32.totalorder %s28, 0
      %p188 = por %p186, %p187
      %p189 = scmp.le.s32.totalorder 1, %s22
      %p190 = scmp.lt.s32.totalorder %s22, 5
      %p191 = pnand %p189, %p190
      %p192 = pneg %p191
      // Predicated region
      $region9: #{tpu_custom_call.1} parent=5 // pred_check
        _
      $region10: #{tpu_custom_call.1} parent=5 // pred_check_branch
        %194 = sbr.rel (%p191) target = $region12
      $region11: #{tpu_custom_call.1} parent=5 // pred_region
        %s195 = ssub.s32 %s22, 1
        // Predicated region
        $region13: #{tpu_custom_call.1} parent=11 // pred_check
          %p196 = pneg %p83
        $region14: #{tpu_custom_call.1} parent=11 // pred_check_branch
          %198 = sbr.rel (%p196) target = $region16
        $region15: #{tpu_custom_call.1} parent=11 // pred_region
          %200 = vsyncadd [#allocation6], 0
          %s201 = sshll.u32 %s1, 4
          %s202 = int_to_ptr.hbm [resolvable:$true] %s201
          %s203 = sshll.u32 [#allocation5], 4
          %s204 = int_to_ptr.vmem [resolvable:$true] %s203
          %209 = dma.hbm_to_vmem [thread:$0]  %s202, 4096, %s204, [#allocation6], 256, 256, 16
        $region16: #{tpu_custom_call.1} parent=11 // pred_fallthru
          _
        // Predicated region
        $region17: #{tpu_custom_call.1} parent=11 // pred_check
          %p210 = pneg %p104
        $region18: #{tpu_custom_call.1} parent=11 // pred_check_branch
          %212 = sbr.rel (%p210) target = $region20
        $region19: #{tpu_custom_call.1} parent=11 // pred_region
          %214 = vsyncadd [#allocation6], 0
          %s215 = sshll.u32 %s2, 4
          %s216 = int_to_ptr.hbm [resolvable:$true] %s215
          %s217 = sshll.u32 [#allocation7], 4
          %s218 = int_to_ptr.vmem [resolvable:$true] %s217
          %223 = dma.hbm_to_vmem [thread:$0]  %s216, 4096, %s218, [#allocation6], 256, 256, 16
        $region20: #{tpu_custom_call.1} parent=11 // pred_fallthru
          _
        // Predicated region
        $region21: #{tpu_custom_call.1} parent=11 // pred_check
          %p224 = pneg %p125
        $region22: #{tpu_custom_call.1} parent=11 // pred_check_branch
          %226 = sbr.rel (%p224) target = $region24
        $region23: #{tpu_custom_call.1} parent=11 // pred_region
          _
        $region24: #{tpu_custom_call.1} parent=11 // pred_fallthru
          _
      $region12: #{tpu_custom_call.1} parent=5 // pred_fallthru
        _
      %p227 = scmp.lt.s32.totalorder %s22, 4
      // Predicated region
      $region25: #{tpu_custom_call.1} parent=5 // pred_check
        %p228 = pneg %p227
      $region26: #{tpu_custom_call.1} parent=5 // pred_check_branch
        %230 = sbr.rel (%p228) target = $region28
      $region27: #{tpu_custom_call.1} parent=5 // pred_region
        // Predicated region
        $region29: #{tpu_custom_call.1} parent=27 // pred_check
          %p231 = pneg %p56
        $region30: #{tpu_custom_call.1} parent=27 // pred_check_branch
          %233 = sbr.rel (%p231) target = $region32
        $region31: #{tpu_custom_call.1} parent=27 // pred_region
          %s234 = sand.u32 %s46, 1
          %s235 = scalar_lea.sflag [#allocation3], %s234
          %s236 = sand.u32 %s46, 1
          %s237 = smul.addr %s236, 8
          %s238 = scalar_lea.vmem [#allocation2], %s237
          %240 = vsyncadd %s235, 0
          %s241 = smul.addr %s29, 2
          %s242 = sadd.s32 %s30, %s241
          %s243 = smul.addr %s242, 8
          %s244 = scalar_lea.hbm %s0, %s243
          %s246 = sshll.u32 %s244, 4
          %s247 = int_to_ptr.hbm [resolvable:$true] %s246
          %s248 = sshll.u32 %s238, 4
          %s249 = int_to_ptr.vmem [resolvable:$true] %s248
          %251 = dma.hbm_to_vmem [thread:$0]  %s247, 128, %s249, %s235
        $region32: #{tpu_custom_call.1} parent=27 // pred_fallthru
          _
      $region28: #{tpu_custom_call.1} parent=5 // pred_fallthru
        _
      %p252 = scmp.le.s32.totalorder 1, %s22
      %p253 = scmp.lt.s32.totalorder %s22, 5
      %p254 = pnand %p252, %p253
      %p255 = pneg %p254
      // Predicated region
      $region33: #{tpu_custom_call.1} parent=5 // pred_check
        _
      $region34: #{tpu_custom_call.1} parent=5 // pred_check_branch
        %257 = sbr.rel (%p254) target = $region36
      $region35: #{tpu_custom_call.1} parent=5 // pred_region
        %s258 = ssub.s32 %s22, 1
        %s259 = sand.u32 %s49, 1
        %s260 = scalar_lea.sflag [#allocation3], %s259
        %s261 = sand.u32 %s49, 1
        %s262 = smul.addr %s261, 8
        %s263 = scalar_lea.vmem [#allocation2], %s262
        // Predicated region
        $region37: #{tpu_custom_call.1} parent=35 // pred_check
          %p264 = pneg %p62
        $region38: #{tpu_custom_call.1} parent=35 // pred_check_branch
          %266 = sbr.rel (%p264) target = $region40
        $region39: #{tpu_custom_call.1} parent=35 // pred_region
          %268 = dma.done %s260, 128
        $region40: #{tpu_custom_call.1} parent=35 // pred_fallthru
          _
        // Predicated region
        $region41: #{tpu_custom_call.1} parent=35 // pred_check
          %p269 = pneg %p83
        $region42: #{tpu_custom_call.1} parent=35 // pred_check_branch
          %271 = sbr.rel (%p269) target = $region44
        $region43: #{tpu_custom_call.1} parent=35 // pred_region
          %273 = dma.done [#allocation6], 4096
        $region44: #{tpu_custom_call.1} parent=35 // pred_fallthru
          _
        // Predicated region
        $region45: #{tpu_custom_call.1} parent=35 // pred_check
          %p274 = pneg %p104
        $region46: #{tpu_custom_call.1} parent=35 // pred_check_branch
          %276 = sbr.rel (%p274) target = $region48
        $region47: #{tpu_custom_call.1} parent=35 // pred_region
          %278 = dma.done [#allocation6], 4096
        $region48: #{tpu_custom_call.1} parent=35 // pred_fallthru
          _
        %s279 = sand.u32 %s49, 1
        %s280 = scalar_lea.sflag [#allocation3], %s279
        %s281 = sand.u32 %s49, 1
        %s282 = smul.addr %s281, 8
        %s283 = scalar_lea.vmem [#allocation2], %s282
        %p284 = pneg %p62
        %p285 = pneg %p59
        %p286 = pneg %p83
        %p287 = pneg %p80
        %p288 = pneg %p104
        %p289 = pneg %p101
        %p290 = pneg %p125
        %p291 = pneg %p122
        %p292 = pneg %p153
        %p293 = pneg %p150
        %s294 = sand.u32 %s140, 1
        %s295 = scalar_lea.sflag [#allocation4], %s294
        %s296 = sand.u32 %s140, 1
        %s297 = smul.addr %s296, 16
        %s298 = scalar_lea.vmem [#allocation8], %s297
        %p299 = pneg %p181
        %p300 = pneg %p178
        %s301 = sand.u32 %s168, 1
        %s302 = scalar_lea.sflag [#allocation10], %s301
        %s303 = sand.u32 %s168, 1
        %s304 = smul.addr %s303, 16
        %s305 = scalar_lea.vmem [#allocation9], %s304
        %v306 = vld [vmem:[%s263] sm:$0xff]
        %v307 = vld [vmem:[#allocation5] sm:$0xff]
        %v308 = vld [vmem:[#allocation5 + $0x8] sm:$0xff]
        %v309 = vld [vmem:[#allocation5 + $0x10] sm:$0xff]
        %v310 = vld [vmem:[#allocation5 + $0x18] sm:$0xff]
        %v311 = vld [vmem:[#allocation5 + $0x20] sm:$0xff]
        %v312 = vld [vmem:[#allocation5 + $0x28] sm:$0xff]
        %v313 = vld [vmem:[#allocation5 + $0x30] sm:$0xff]
        %v314 = vld [vmem:[#allocation5 + $0x38] sm:$0xff]
        %v315 = vld [vmem:[#allocation5 + $0x40] sm:$0xff]
        %v316 = vld [vmem:[#allocation5 + $0x48] sm:$0xff]
        %v317 = vld [vmem:[#allocation5 + $0x50] sm:$0xff]
        %v318 = vld [vmem:[#allocation5 + $0x58] sm:$0xff]
        %v319 = vld [vmem:[#allocation5 + $0x60] sm:$0xff]
        %v320 = vld [vmem:[#allocation5 + $0x68] sm:$0xff]
        %v321 = vld [vmem:[#allocation5 + $0x70] sm:$0xff]
        %v322 = vld [vmem:[#allocation5 + $0x78] sm:$0xff]
        %v323 = vld [vmem:[#allocation5 + $0x80] sm:$0xff]
        %v324 = vld [vmem:[#allocation5 + $0x88] sm:$0xff]
        %v325 = vld [vmem:[#allocation5 + $0x90] sm:$0xff]
        %v326 = vld [vmem:[#allocation5 + $0x98] sm:$0xff]
        %v327 = vld [vmem:[#allocation5 + $0xa0] sm:$0xff]
        %v328 = vld [vmem:[#allocation5 + $0xa8] sm:$0xff]
        %v329 = vld [vmem:[#allocation5 + $0xb0] sm:$0xff]
        %v330 = vld [vmem:[#allocation5 + $0xb8] sm:$0xff]
        %v331 = vld [vmem:[#allocation5 + $0xc0] sm:$0xff]
        %v332 = vld [vmem:[#allocation5 + $0xc8] sm:$0xff]
        %v333 = vld [vmem:[#allocation5 + $0xd0] sm:$0xff]
        %v334 = vld [vmem:[#allocation5 + $0xd8] sm:$0xff]
        %v335 = vld [vmem:[#allocation5 + $0xe0] sm:$0xff]
        %v336 = vld [vmem:[#allocation5 + $0xe8] sm:$0xff]
        %v337 = vld [vmem:[#allocation5 + $0xf0] sm:$0xff]
        %v338 = vld [vmem:[#allocation5 + $0xf8] sm:$0xff]
        %v339 = vld [vmem:[%s3] sm:$0x3]
        %v341 = vperm.slane %v339, 0
        %v342 = vperm.slane %v339, 1
        %345 = vmatpush.msra.mxu0 %v337
        %346 = vmatpush.msra.mxu0 %v335
        %347 = vmatpush.msra.mxu0 %v333
        %348 = vmatpush.msra.mxu0 %v331
        %349 = vmatpush.msra.mxu0 %v329
        %350 = vmatpush.msra.mxu0 %v327
        %351 = vmatpush.msra.mxu0 %v325
        %352 = vmatpush.msra.mxu0 %v323
        %353 = vmatpush.msra.mxu0 %v321
        %354 = vmatpush.msra.mxu0 %v319
        %355 = vmatpush.msra.mxu0 %v317
        %356 = vmatpush.msra.mxu0 %v315
        %357 = vmatpush.msra.mxu0 %v313
        %358 = vmatpush.msra.mxu0 %v311
        %359 = vmatpush.msra.mxu0 %v309
        %360 = vmatpush.msra.mxu0 %v307
        %361 = vmatmul.f32.gmra.mxu0 %v306
        %v362 = vpop.f32.mrf.mxu0
        %v363 = vadd.f32 %v341, %v362
        %364 = vdwg.mxu0
        %365 = vmatpush.msra.mxu0 %v338
        %366 = vmatpush.msra.mxu0 %v336
        %367 = vmatpush.msra.mxu0 %v334
        %368 = vmatpush.msra.mxu0 %v332
        %369 = vmatpush.msra.mxu0 %v330
        %370 = vmatpush.msra.mxu0 %v328
        %371 = vmatpush.msra.mxu0 %v326
        %372 = vmatpush.msra.mxu0 %v324
        %373 = vmatpush.msra.mxu0 %v322
        %374 = vmatpush.msra.mxu0 %v320
        %375 = vmatpush.msra.mxu0 %v318
        %376 = vmatpush.msra.mxu0 %v316
        %377 = vmatpush.msra.mxu0 %v314
        %378 = vmatpush.msra.mxu0 %v312
        %379 = vmatpush.msra.mxu0 %v310
        %380 = vmatpush.msra.mxu0 %v308
        %381 = vmatmul.f32.gmra.mxu0 %v306
        %v382 = vpop.f32.mrf.mxu0
        %v383 = vadd.f32 %v342, %v382
        %384 = vdwg.mxu0
        %385 = vst [vmem:[%s298] sm:$0xff] %v363
        %386 = vst [vmem:[%s298 + $0x8] sm:$0xff] %v383
        %v387 = vld [vmem:[#allocation7] sm:$0xff]
        %v388 = vld [vmem:[#allocation7 + $0x8] sm:$0xff]
        %v389 = vld [vmem:[#allocation7 + $0x10] sm:$0xff]
        %v390 = vld [vmem:[#allocation7 + $0x18] sm:$0xff]
        %v391 = vld [vmem:[#allocation7 + $0x20] sm:$0xff]
        %v392 = vld [vmem:[#allocation7 + $0x28] sm:$0xff]
        %v393 = vld [vmem:[#allocation7 + $0x30] sm:$0xff]
        %v394 = vld [vmem:[#allocation7 + $0x38] sm:$0xff]
        %v395 = vld [vmem:[#allocation7 + $0x40] sm:$0xff]
        %v396 = vld [vmem:[#allocation7 + $0x48] sm:$0xff]
        %v397 = vld [vmem:[#allocation7 + $0x50] sm:$0xff]
        %v398 = vld [vmem:[#allocation7 + $0x58] sm:$0xff]
        %v399 = vld [vmem:[#allocation7 + $0x60] sm:$0xff]
        %v400 = vld [vmem:[#allocation7 + $0x68] sm:$0xff]
        %v401 = vld [vmem:[#allocation7 + $0x70] sm:$0xff]
        %v402 = vld [vmem:[#allocation7 + $0x78] sm:$0xff]
        %v403 = vld [vmem:[#allocation7 + $0x80] sm:$0xff]
        %v404 = vld [vmem:[#allocation7 + $0x88] sm:$0xff]
        %v405 = vld [vmem:[#allocation7 + $0x90] sm:$0xff]
        %v406 = vld [vmem:[#allocation7 + $0x98] sm:$0xff]
        %v407 = vld [vmem:[#allocation7 + $0xa0] sm:$0xff]
        %v408 = vld [vmem:[#allocation7 + $0xa8] sm:$0xff]
        %v409 = vld [vmem:[#allocation7 + $0xb0] sm:$0xff]
        %v410 = vld [vmem:[#allocation7 + $0xb8] sm:$0xff]
        %v411 = vld [vmem:[#allocation7 + $0xc0] sm:$0xff]
        %v412 = vld [vmem:[#allocation7 + $0xc8] sm:$0xff]
        %v413 = vld [vmem:[#allocation7 + $0xd0] sm:$0xff]
        %v414 = vld [vmem:[#allocation7 + $0xd8] sm:$0xff]
        %v415 = vld [vmem:[#allocation7 + $0xe0] sm:$0xff]
        %v416 = vld [vmem:[#allocation7 + $0xe8] sm:$0xff]
        %v417 = vld [vmem:[#allocation7 + $0xf0] sm:$0xff]
        %v418 = vld [vmem:[#allocation7 + $0xf8] sm:$0xff]
        %419 = vmatpush.msra.mxu0 %v417
        %420 = vmatpush.msra.mxu0 %v415
        %421 = vmatpush.msra.mxu0 %v413
        %422 = vmatpush.msra.mxu0 %v411
        %423 = vmatpush.msra.mxu0 %v409
        %424 = vmatpush.msra.mxu0 %v407
        %425 = vmatpush.msra.mxu0 %v405
        %426 = vmatpush.msra.mxu0 %v403
        %427 = vmatpush.msra.mxu0 %v401
        %428 = vmatpush.msra.mxu0 %v399
        %429 = vmatpush.msra.mxu0 %v397
        %430 = vmatpush.msra.mxu0 %v395
        %431 = vmatpush.msra.mxu0 %v393
        %432 = vmatpush.msra.mxu0 %v391
        %433 = vmatpush.msra.mxu0 %v389
        %434 = vmatpush.msra.mxu0 %v387
        %435 = vmatmul.f32.gmra.mxu0 %v306
        %v436 = vpop.f32.mrf.mxu0
        %v437 = vadd.f32 0.0, %v436
        %438 = vdwg.mxu0
        %439 = vmatpush.msra.mxu0 %v418
        %440 = vmatpush.msra.mxu0 %v416
        %441 = vmatpush.msra.mxu0 %v414
        %442 = vmatpush.msra.mxu0 %v412
        %443 = vmatpush.msra.mxu0 %v410
        %444 = vmatpush.msra.mxu0 %v408
        %445 = vmatpush.msra.mxu0 %v406
        %446 = vmatpush.msra.mxu0 %v404
        %447 = vmatpush.msra.mxu0 %v402
        %448 = vmatpush.msra.mxu0 %v400
        %449 = vmatpush.msra.mxu0 %v398
        %450 = vmatpush.msra.mxu0 %v396
        %451 = vmatpush.msra.mxu0 %v394
        %452 = vmatpush.msra.mxu0 %v392
        %453 = vmatpush.msra.mxu0 %v390
        %454 = vmatpush.msra.mxu0 %v388
        %455 = vmatmul.f32.gmra.mxu0 %v306
        %v456 = vpop.f32.mrf.mxu0
        %v457 = vadd.f32 0.0, %v456
        %458 = vdwg.mxu0
        %459 = vst [vmem:[%s305] sm:$0xff] %v437
        %460 = vst [vmem:[%s305 + $0x8] sm:$0xff] %v457
        %s461 = sand.u32 %s140, 1
        %s462 = scalar_lea.sflag [#allocation4], %s461
        %s463 = sand.u32 %s140, 1
        %s464 = smul.addr %s463, 16
        %s465 = scalar_lea.vmem [#allocation8], %s464
        %s466 = sand.u32 %s168, 1
        %s467 = scalar_lea.sflag [#allocation10], %s466
        %s468 = sand.u32 %s168, 1
        %s469 = smul.addr %s468, 16
        %s470 = scalar_lea.vmem [#allocation9], %s469
        // Predicated region
        $region49: #{tpu_custom_call.1} parent=35 // pred_check
          %p471 = pneg %p150
        $region50: #{tpu_custom_call.1} parent=35 // pred_check_branch
          %473 = sbr.rel (%p471) target = $region52
        $region51: #{tpu_custom_call.1} parent=35 // pred_region
          %475 = vsyncadd %s462, 0
          %s476 = smul.addr %s32, 2
          %s477 = smul.addr %s31, 4
          %s478 = sadd.s32 %s476, %s477
          %s479 = smul.addr %s478, 8
          %s480 = scalar_lea.hbm %s4, %s479
          %s482 = sshll.u32 %s465, 4
          %s483 = int_to_ptr.vmem [resolvable:$true] %s482
          %s484 = sshll.u32 %s480, 4
          %s485 = int_to_ptr.hbm [resolvable:$true] %s484
          %487 = dma.vmem_to_hbm [thread:$0]  %s483, 256, %s485, %s462
        $region52: #{tpu_custom_call.1} parent=35 // pred_fallthru
          _
        // Predicated region
        $region53: #{tpu_custom_call.1} parent=35 // pred_check
          %p488 = pneg %p178
        $region54: #{tpu_custom_call.1} parent=35 // pred_check_branch
          %490 = sbr.rel (%p488) target = $region56
        $region55: #{tpu_custom_call.1} parent=35 // pred_region
          %492 = vsyncadd %s467, 0
          %s493 = smul.addr %s32, 2
          %s494 = smul.addr %s31, 4
          %s495 = sadd.s32 %s493, %s494
          %s496 = smul.addr %s495, 8
          %s497 = scalar_lea.hbm %s5, %s496
          %s499 = sshll.u32 %s470, 4
          %s500 = int_to_ptr.vmem [resolvable:$true] %s499
          %s501 = sshll.u32 %s497, 4
          %s502 = int_to_ptr.hbm [resolvable:$true] %s501
          %504 = dma.vmem_to_hbm [thread:$0]  %s500, 256, %s502, %s467
        $region56: #{tpu_custom_call.1} parent=35 // pred_fallthru
          _
      $region36: #{tpu_custom_call.1} parent=5 // pred_fallthru
        _
      %p505 = scmp.le.s32.totalorder 2, %s22
      // Predicated region
      $region57: #{tpu_custom_call.1} parent=5 // pred_check
        %p506 = pneg %p505
      $region58: #{tpu_custom_call.1} parent=5 // pred_check_branch
        %508 = sbr.rel (%p506) target = $region60
      $region59: #{tpu_custom_call.1} parent=5 // pred_region
        %s509 = ssub.s32 %s22, 2
        // Predicated region
        $region61: #{tpu_custom_call.1} parent=59 // pred_check
          %p510 = pneg %p156
        $region62: #{tpu_custom_call.1} parent=59 // pred_check_branch
          %512 = sbr.rel (%p510) target = $region64
        $region63: #{tpu_custom_call.1} parent=59 // pred_region
          %s513 = sand.u32 %s141, 1
          %s514 = scalar_lea.sflag [#allocation4], %s513
          %s515 = sand.u32 %s141, 1
          %s516 = smul.addr %s515, 16
          %s517 = scalar_lea.vmem [#allocation8], %s516
          %519 = dma.done %s514, 256
        $region64: #{tpu_custom_call.1} parent=59 // pred_fallthru
          _
        // Predicated region
        $region65: #{tpu_custom_call.1} parent=59 // pred_check
          %p520 = pneg %p184
        $region66: #{tpu_custom_call.1} parent=59 // pred_check_branch
          %522 = sbr.rel (%p520) target = $region68
        $region67: #{tpu_custom_call.1} parent=59 // pred_region
          %s523 = sand.u32 %s169, 1
          %s524 = scalar_lea.sflag [#allocation10], %s523
          %s525 = sand.u32 %s169, 1
          %s526 = smul.addr %s525, 16
          %s527 = scalar_lea.vmem [#allocation9], %s526
          %529 = dma.done %s524, 256
        $region68: #{tpu_custom_call.1} parent=59 // pred_fallthru
          _
      $region60: #{tpu_custom_call.1} parent=5 // pred_fallthru
        _
    $region6: #{tpu_custom_call.1} parent=1 // loop_footer
      %s26 = sadd.s32 1, %s22
    $region7: #{tpu_custom_call.1} parent=1 // loop_footer_branch
      %21 = sbr.rel target = $region3
    $region8: #{tpu_custom_call.1} parent=1 // loop_exit
      _
    %530 = vsyncpa [#allocation3], 1
    %s531 = scalar_lea.sflag [#allocation3], 1
    %532 = vsyncpa %s531, 1
    %533 = vsyncpa [#allocation6], 1
    %534 = vsyncpa [#allocation4], 1
    %s535 = scalar_lea.sflag [#allocation4], 1
    %536 = vsyncpa %s535, 1
    %537 = vsyncpa [#allocation10], 1
    %s538 = scalar_lea.sflag [#allocation10], 1
    %539 = vsyncpa %s538, 1

</llo_original>
